<compile_context>
chip_gen: v5e
topology: v5e:2x2
jax: 0.10.0
libtpu: 0.0.40
codegen_flags: <defaults>
</compile_context>

<pallas_src>
import functools
import math

import jax
import jax.numpy as jnp
from jax.experimental import pallas as pl
from jax.experimental.pallas import tpu as pltpu


OUT_LANES = 128  # packed head-output width (lane-dense, full-vreg stores)

_CPARAMS = pltpu.CompilerParams(
    dimension_semantics=("parallel",),
    vmem_limit_bytes=32 * 1024 * 1024,
)


# --------------------------------------------------------------------------- helpers

def _pick_block_rows(m, cap):
    """Row-block size policy.

    * m <= cap  -> use the whole row range (grid=(1,)): no forced pipelining /
      per-step overhead on tiny problems (v5e/v6e have a single TensorCore, the
      grid is a serial loop there).
    * m > cap   -> largest power-of-two divisor <= cap, preferring an EVEN number
      of grid steps so v7x's two TensorCores split the 'parallel' axis evenly.
    """
    if m <= cap:
        return m
    best = None
    for cand in (1024, 512, 256, 128, 64, 32, 16, 8):
        if cand > cap or m % cand != 0:
            continue
        if (m // cand) % 2 == 0:
            return cand
        if best is None:
            best = cand
    return best if best is not None else m


def _const_spec(shape):
    """BlockSpec for a weight/bias that is identical for every grid step.

    Constant index_map + single buffering (double-buffering a constant block only
    doubles its resident VMEM footprint, which matters on v7x's 64 MiB VMEM)."""
    zeros = (0,) * len(shape)
    return pl.BlockSpec(shape, lambda i, z=zeros: z, pipeline_mode=pl.Buffered(1))


def inverse_sigmoid(x, eps=1e-5):
    x = jnp.clip(x, 0.0, 1.0)
    x1 = jnp.clip(x, eps, None)
    x2 = jnp.clip(1.0 - x, eps, None)
    return jnp.log(x1 / x2)


# --------------------------------------------------------------------------- kernels

def _linear_kernel(x_ref, w_ref, b_ref, o_ref):
    # input_proj: Conv1d(feat_dim, hidden, k=1) == matmul over channels.
    # x arrives bf16 (cast once in the wrapper) -> HBM-bound call reads half bytes.
    y = jnp.dot(x_ref[...], w_ref[...], preferred_element_type=jnp.float32) + b_ref[...]
    o_ref[...] = y.astype(o_ref.dtype)


def pallas_linear(x_bf16, w_bf16, b_f32):
    """y = x @ w + b.  x:[M,K] bf16, w:[K,N] bf16, b:[N] f32 -> f32 [M,N]."""
    M, K = x_bf16.shape
    K2, N = w_bf16.shape
    assert K == K2
    bm = _pick_block_rows(M, cap=1024)
    return pl.pallas_call(
        _linear_kernel,
        out_shape=jax.ShapeDtypeStruct((M, N), jnp.float32),
        grid=(M // bm,),
        in_specs=[
            pl.BlockSpec((bm, K), lambda i: (i, 0)),
            _const_spec((K, N)),
            _const_spec((1, N)),
        ],
        out_specs=pl.BlockSpec((bm, N), lambda i: (i, 0)),
        compiler_params=_CPARAMS,
    )(x_bf16, w_bf16, b_f32.reshape(1, N))


def _fused_head_kernel(x_ref, ref_ref,
                       w1_ref, b1_ref, w2_ref, b2_ref,
                       cw_ref, cb_ref, wfin_ref, bfin_ref, cs_ref,
                       o_ref, *, H, fuse_final):
    xf = x_ref[...]                                                   # [bm, H] f32
    xb = xf.astype(jnp.bfloat16)

    # ---- bbox MLP(H, H, 2, 3): first two relu layers (third layer fused below)
    h = jnp.dot(xb, w1_ref[...], preferred_element_type=jnp.float32) + b1_ref[...]
    h = jnp.maximum(h, 0.0)
    h = jnp.dot(h.astype(jnp.bfloat16), w2_ref[...],
                preferred_element_type=jnp.float32) + b2_ref[...]
    h = jnp.maximum(h, 0.0)

    # ---- class_embed + visual-feature normalization (f32, EUP rsqrt)
    ce = jnp.dot(xb, cw_ref[...], preferred_element_type=jnp.float32) + cb_ref[...]
    inv_n = jax.lax.rsqrt(jnp.sum(ce * ce, axis=-1, keepdims=True) + 1e-12)
    vn = ce * inv_n

    # ---- fused "placed" final matmul: rows [0:H]=bbox_w3, [H:2H]=actionness,
    #      [2H:3H]=normalized text feats; columns 0..1 / 2 / 3..3+C of the 128-lane
    #      output slab.  Single MXU pass when 3H fits one LHS tile, else 3 sliced dots.
    if fuse_final:
        lhs = jnp.concatenate([h, xf, vn], axis=-1).astype(jnp.bfloat16)  # [bm, 3H]
        fused = jnp.dot(lhs, wfin_ref[...], preferred_element_type=jnp.float32)
    else:
        fused = (jnp.dot(h.astype(jnp.bfloat16), wfin_ref[0:H],
                         preferred_element_type=jnp.float32)
                 + jnp.dot(xb, wfin_ref[H:2 * H],
                           preferred_element_type=jnp.float32)
                 + jnp.dot(vn.astype(jnp.bfloat16), wfin_ref[2 * H:3 * H],
                           preferred_element_type=jnp.float32))

    # exp(logit_scale) applied post-matmul in f32 (class cols only; 1.0 elsewhere),
    # then the box/actionness biases (zero on class cols).
    fused = fused * cs_ref[...] + bfin_ref[...]

    # ---- pack: cols 0..1 = sigmoid(box + center prior), everything else as-is
    col = jax.lax.broadcasted_iota(jnp.int32, fused.shape, 1)
    boxed = jax.nn.sigmoid(fused + jnp.where(col == 0, ref_ref[...], 0.0))
    o_ref[...] = jnp.where(col < 2, boxed, fused).astype(o_ref.dtype)


def pallas_fused_query_heads(hs_last, ref_bs, kp):
    """hs_last: [M, H] f32, ref_bs: [M, 1] f32 -> packed [M, OUT_LANES] f32."""
    M, H = hs_last.shape
    out_w = kp["head_wfin"].shape[1]
    bm = _pick_block_rows(M, cap=256)   # smaller cap: controls vreg/spill pressure
    kernel = functools.partial(_fused_head_kernel, H=H, fuse_final=kp["fuse_final"])
    return pl.pallas_call(
        kernel,
        out_shape=jax.ShapeDtypeStruct((M, out_w), jnp.float32),
        grid=(M // bm,),
        in_specs=[
            pl.BlockSpec((bm, H), lambda i: (i, 0)),
            pl.BlockSpec((bm, 1), lambda i: (i, 0)),
            _const_spec((H, H)),            # bbox_w1
            _const_spec((1, H)),            # bbox_b1
            _const_spec((H, H)),            # bbox_w2
            _const_spec((1, H)),            # bbox_b2
            _const_spec((H, H)),            # class_w
            _const_spec((1, H)),            # class_b
            _const_spec((3 * H, out_w)),    # stacked placed final weight
            _const_spec((1, out_w)),        # placed final bias (box/actionness)
            _const_spec((1, out_w)),        # per-column scale (exp(logit_scale))
        ],
        out_specs=pl.BlockSpec((bm, out_w), lambda i: (i, 0)),
        compiler_params=_CPARAMS,
    )(hs_last, ref_bs,
      kp["bbox_w1"], kp["bbox_b1"], kp["bbox_w2"], kp["bbox_b2"],
      kp["class_w"], kp["class_b"],
      kp["head_wfin"], kp["head_bfin"], kp["head_colscale"])


def _salient_kernel(xm_ref, w1_ref, b1_ref, w2_ref, b2_ref, o_ref, *, T):
    # salient_head: Conv1d(H, H, k=3, pad=1) -> LeakyReLU(0.2) -> Conv1d(H, 1, k=1).
    # Zero padding folded in via roll + edge masks (no HBM pad materialization).
    x = xm_ref[0]                                                   # f32 [T, H]
    row = jax.lax.broadcasted_iota(jnp.int32, x.shape, 0)
    x_prev = jnp.where(row == 0, 0.0, pltpu.roll(x, 1, 0))          # x[t-1], 0 at t=0
    x_next = jnp.where(row == T - 1, 0.0, pltpu.roll(x, T - 1, 0))  # x[t+1], 0 at end
    y = (jnp.dot(x_prev.astype(jnp.bfloat16), w1_ref[0], preferred_element_type=jnp.float32)
         + jnp.dot(x.astype(jnp.bfloat16), w1_ref[1], preferred_element_type=jnp.float32)
         + jnp.dot(x_next.astype(jnp.bfloat16), w1_ref[2], preferred_element_type=jnp.float32)
         + b1_ref[...])
    y = jnp.where(y >= 0.0, y, 0.2 * y)                             # LeakyReLU(0.2), f32
    # H -> 1 projection as VPU multiply + lane reduction (XLU) instead of a
    # 1-useful-lane MXU pass; f32 throughout.
    z = jnp.sum(y * w2_ref[...], axis=-1, keepdims=True) + b2_ref[...]   # [T, 1]
    o_ref[0] = z.astype(o_ref.dtype)


def pallas_salient_head(memory, kp):
    # TODO(synk): for very long T on v7x (64 MiB VMEM), tile T with a 1-row halo
    # instead of streaming a full (1, T, H) block per batch element.
    B, T, H = memory.shape
    return pl.pallas_call(
        functools.partial(_salient_kernel, T=T),
        out_shape=jax.ShapeDtypeStruct((B, T, 1), jnp.float32),
        grid=(B,),
        in_specs=[
            pl.BlockSpec((1, T, H), lambda b: (b, 0, 0)),
            _const_spec((3, H, H)),
            _const_spec((1, H)),
            _const_spec((1, H)),
            _const_spec((1, 1)),
        ],
        out_specs=pl.BlockSpec((1, T, 1), lambda b: (b, 0, 0)),
        compiler_params=_CPARAMS,
    )(memory, kp["sal_w1"], kp["sal_b1"], kp["sal_w2row"], kp["sal_b2"])


# ------------------------------------------------------------------------ parameters

def make_params(key, feat_dim, hidden, num_queries, num_text_classes):
    ks = jax.random.split(key, 16)
    n = lambda k, shape, s=0.05: (s * jax.random.normal(k, shape)).astype(jnp.float32)
    bias_value = -math.log((1.0 - 0.01) / 0.01)
    return {
        "input_proj_w": n(ks[0], (feat_dim, hidden)),
        "input_proj_b": n(ks[1], (hidden,)),
        "query_embed": n(ks[2], (num_queries, hidden), 0.5),
        "bbox_w1": n(ks[3], (hidden, hidden)), "bbox_b1": n(ks[4], (hidden,)),
        "bbox_w2": n(ks[5], (hidden, hidden)), "bbox_b2": n(ks[6], (hidden,)),
        "bbox_w3": jnp.zeros((hidden, 2), jnp.float32),          # zero-init (as in torch)
        "bbox_b3": jnp.zeros((2,), jnp.float32),
        "class_w": n(ks[7], (hidden, hidden)),
        "class_b": jnp.full((hidden,), bias_value, jnp.float32),
        "act_w": n(ks[8], (hidden, 1)),
        "act_b": jnp.full((1,), bias_value, jnp.float32),
        "sal_w1": n(ks[9], (3, hidden, hidden)),
        "sal_b1": n(ks[10], (hidden,)),
        "sal_w2": n(ks[11], (hidden, 1)),
        "sal_b2": n(ks[12], (1,)),
        "logit_scale": jnp.array(math.log(1.0 / 0.07), jnp.float32),
        "text_feats": n(ks[13], (num_text_classes, hidden), 1.0),
        "ref_w": n(ks[14], (hidden, 1), 0.5),
        "ref_b": n(ks[15], (1,)),
    }


def prep_kernel_params(p):
    """One-time packing: bf16 MXU weights, text normalization hoisted out of the
    kernel, final weights stacked into one [3H, 128] placed matrix so the last head
    matmul is a single MXU pass, and exp(logit_scale) kept as an f32 per-column
    scale applied AFTER the matmul (matches reference rounding)."""
    H = p["input_proj_w"].shape[1]
    C = int(p["text_feats"].shape[0])
    assert 3 + C <= OUT_LANES, "packed output slab supports at most OUT_LANES-3 classes"
    assert H % 8 == 0, "hidden dim must be sublane-aligned"
    out_w = OUT_LANES
    bf = lambda a: a.astype(jnp.bfloat16)

    t = p["text_feats"]
    t = t * jax.lax.rsqrt(jnp.sum(t * t, axis=-1, keepdims=True) + 1e-12)   # f32 norm

    wfin = jnp.zeros((3 * H, out_w), jnp.float32)
    wfin = wfin.at[0:H, 0:2].set(p["bbox_w3"])              # bbox layer-3 -> cols 0..1
    wfin = wfin.at[H:2 * H, 2].set(p["act_w"][:, 0])        # actionness   -> col 2
    wfin = wfin.at[2 * H:3 * H, 3:3 + C].set(t.T)           # text feats   -> cols 3..3+C
    bfin = jnp.zeros((1, out_w), jnp.float32)
    bfin = bfin.at[0, 0:2].set(p["bbox_b3"])
    bfin = bfin.at[0, 2].set(p["act_b"][0])
    colscale = jnp.ones((1, out_w), jnp.float32)
    colscale = colscale.at[0, 3:3 + C].set(jnp.exp(p["logit_scale"]))

    return {
        "num_classes": C,
        "fuse_final": H <= 128,   # single MXU pass only while 3H fits one LHS tile
        "input_proj_w": bf(p["input_proj_w"]),
        "bbox_w1": bf(p["bbox_w1"]), "bbox_b1": p["bbox_b1"].reshape(1, H),
        "bbox_w2": bf(p["bbox_w2"]), "bbox_b2": p["bbox_b2"].reshape(1, H),
        "class_w": bf(p["class_w"]), "class_b": p["class_b"].reshape(1, H),
        "head_wfin": bf(wfin), "head_bfin": bfin, "head_colscale": colscale,
        "sal_w1": bf(p["sal_w1"]), "sal_b1": p["sal_b1"].reshape(1, H),
        "sal_w2row": p["sal_w2"].reshape(1, H), "sal_b2": p["sal_b2"].reshape(1, 1),
    }


# ---------------------------------------------------------------------------- forward

def _transformer_standin(src_proj, pos, mask, query_embed, ref_w, ref_b, L):
    """Deterministic plain-JAX stand-in for the external transformer sub-module."""
    memory_last = jnp.tanh(src_proj + pos)
    valid = (~mask).astype(jnp.float32)[:, :, None]
    pooled = (memory_last * valid).sum(axis=1) / jnp.maximum(valid.sum(axis=1), 1.0)
    hs = jnp.stack([jnp.tanh(query_embed[None] * (1.0 + 0.1 * l) + pooled[:, None, :])
                    for l in range(L)], axis=0)
    reference = jax.nn.sigmoid(query_embed @ ref_w + ref_b)
    B = src_proj.shape[0]
    reference = jnp.broadcast_to(reference[None], (B,) + reference.shape)
    return memory_last[None], hs, reference


def _pos_standin(B, T, H):
    pos_t = jnp.arange(T, dtype=jnp.float32)[:, None]
    pos_d = jnp.arange(H, dtype=jnp.float32)[None, :]
    return jnp.broadcast_to(jnp.sin(pos_t / (10.0 ** (pos_d / H)))[None], (B, T, H))


def conditional_detr_forward(params, kparams, clip_feat, mask, num_dec_layers=2):
    """Eval-mode forward: target_type != 'none', norm_embed, exp_logit_scale,
    actionness_loss, salient_loss enabled; enable_refine / enable_posPrior /
    eval_proposal / enable_classAgnostic disabled."""
    B, T, feat_dim = clip_feat.shape
    Q, H = params["query_embed"].shape
    C = kparams["num_classes"]

    # TODO(synk): backbone / transformer / CLIP text_encoder / refine_decoder are
    # external sub-modules; replaced by deterministic plain-JAX stand-ins here.
    pos = _pos_standin(B, T, H)

    # ---- input_proj (Conv1d k=1) -- Pallas channel matmul, bf16 activations
    clip_bf = clip_feat.astype(jnp.bfloat16)
    src_proj = pallas_linear(clip_bf.reshape(B * T, feat_dim),
                             kparams["input_proj_w"], params["input_proj_b"]
                             ).reshape(B, T, H)

    memory, hs, reference = _transformer_standin(
        src_proj, pos, mask, params["query_embed"],
        params["ref_w"], params["ref_b"], num_dec_layers)

    out = {"memory": memory, "hs": hs}

    # ---- salient head (Pallas conv stack, padding folded into the kernel)
    out["salient_logits"] = pallas_salient_head(memory[-1], kparams)

    # ---- fused per-query heads on hs[-1] only (only the last level is consumed)
    ref_bs = inverse_sigmoid(reference).reshape(B * Q, 1)
    packed = pallas_fused_query_heads(hs[-1].reshape(B * Q, H), ref_bs, kparams)
    packed = packed.reshape(B, Q, -1)
    out["pred_boxes"] = packed[..., 0:2]
    out["actionness_logits"] = packed[..., 2:3]
    out["class_logits"] = packed[..., 3:3 + C]
    return out


# --------------------------------------------------------------------- f32 reference

def reference_forward(p, clip_feat, mask, num_dec_layers=2):
    """Plain-JAX f32 reference mirroring the PyTorch semantics (same stand-ins)."""
    B, T, _ = clip_feat.shape
    Q, H = p["query_embed"].shape
    pos = _pos_standin(B, T, H)
    src_proj = clip_feat @ p["input_proj_w"] + p["input_proj_b"]
    memory, hs, reference = _transformer_standin(
        src_proj, pos, mask, p["query_embed"], p["ref_w"], p["ref_b"], num_dec_layers)

    x = hs[-1]
    h = jax.nn.relu(x @ p["bbox_w1"] + p["bbox_b1"])
    h = jax.nn.relu(h @ p["bbox_w2"] + p["bbox_b2"])
    tmp = h @ p["bbox_w3"] + p["bbox_b3"]
    tmp = tmp.at[..., 0:1].add(inverse_sigmoid(reference))
    boxes = jax.nn.sigmoid(tmp)
    act = x @ p["act_w"] + p["act_b"]
    ce = x @ p["class_w"] + p["class_b"]
    v = ce / jnp.linalg.norm(ce, axis=-1, keepdims=True)
    t = p["text_feats"] / jnp.linalg.norm(p["text_feats"], axis=-1, keepdims=True)
    cls = jnp.einsum("bqd,cd->bqc", v, t) * jnp.exp(p["logit_scale"])

    m = memory[-1]
    xp = jnp.pad(m, ((0, 0), (1, 1), (0, 0)))
    y = (xp[:, :-2] @ p["sal_w1"][0] + xp[:, 1:-1] @ p["sal_w1"][1]
         + xp[:, 2:] @ p["sal_w1"][2] + p["sal_b1"])
    y = jnp.where(y >= 0.0, y, 0.2 * y)
    sal = y @ p["sal_w2"] + p["sal_b2"]
    return {"pred_boxes": boxes, "actionness_logits": act,
            "class_logits": cls, "salient_logits": sal}


# ------------------------------------------------------------------------------- main

if __name__ == "__main__":
    B, T, FEAT, H, Q, L, C = 2, 16, 64, 32, 8, 2, 5

    key = jax.random.PRNGKey(0)
    k_param, k_feat = jax.random.split(key)
    params = make_params(k_param, feat_dim=FEAT, hidden=H,
                         num_queries=Q, num_text_classes=C)
    kparams = prep_kernel_params(params)
    clip_feat = jax.random.normal(k_feat, (B, T, FEAT), dtype=jnp.float32)
    mask = jnp.zeros((B, T), dtype=bool)   # no padding

    out = conditional_detr_forward(params, kparams, clip_feat, mask, num_dec_layers=L)
    jax.block_until_ready(out)

    assert out["pred_boxes"].shape == (B, Q, 2)
    assert out["class_logits"].shape == (B, Q, C)
    assert out["actionness_logits"].shape == (B, Q, 1)
    assert out["salient_logits"].shape == (B, T, 1)

    # Tolerance check vs. plain-JAX f32 reference (bf16 MXU deviation expected).
    ref = reference_forward(params, clip_feat, mask, num_dec_layers=L)
    md = lambda a, b: float(jnp.max(jnp.abs(a - b)))
    assert md(out["pred_boxes"], ref["pred_boxes"]) < 5e-2
    assert md(out["actionness_logits"], ref["actionness_logits"]) < 5e-2
    assert md(out["salient_logits"], ref["salient_logits"]) < 5e-2
    assert md(out["class_logits"], ref["class_logits"]) < 3e-1

    print("KERNEL_OK")
</pallas_src>

<mosaic_0001>
module attributes {stable_mosaic.version = 11 : i64} {
  func.func @_linear_kernel(%arg0: i32, %arg1: memref<32x64xbf16, #tpu.memory_space<vmem>>, %arg2: memref<64x32xbf16, #tpu.memory_space<vmem>>, %arg3: memref<1x32xf32, #tpu.memory_space<vmem>>, %arg4: memref<32x32xf32, #tpu.memory_space<vmem>>) attributes {dimension_semantics = [#tpu.dimension_semantics<parallel>], iteration_bounds = array<i64: 1>, scalar_prefetch = 0 : i64, scratch_operands = 0 : i64, tpu.core_type = #tpu.core_type<tc>, window_params = [{transform_indices = @transform_0, window_bounds = array<i64: 32, 64>}, {pipeline_mode = #tpu.pipeline_mode<synchronous>, transform_indices = @transform_1, window_bounds = array<i64: 64, 32>}, {pipeline_mode = #tpu.pipeline_mode<synchronous>, transform_indices = @transform_2, window_bounds = array<i64: 1, 32>}, {transform_indices = @transform_3, window_bounds = array<i64: 32, 32>}]} {
    %c0 = arith.constant 0 : index
    %c0_0 = arith.constant 0 : index
    %0 = vector.load %arg1[%c0, %c0_0] : memref<32x64xbf16, #tpu.memory_space<vmem>>, vector<32x64xbf16>
    %c0_1 = arith.constant 0 : index
    %c0_2 = arith.constant 0 : index
    %1 = vector.load %arg2[%c0_1, %c0_2] : memref<64x32xbf16, #tpu.memory_space<vmem>>, vector<64x32xbf16>
    %cst = arith.constant dense<0.000000e+00> : vector<32x32xf32>
    %2 = tpu.matmul %0, %1, %cst {dimension_numbers = #tpu.dot_dimension_numbers<[1], [0], [0], [1], [0, 0, 1, 1], [], []>} : vector<32x64xbf16>, vector<64x32xbf16>, vector<32x32xf32> -> vector<32x32xf32>
    %c0_3 = arith.constant 0 : index
    %c0_4 = arith.constant 0 : index
    %3 = vector.load %arg3[%c0_3, %c0_4] : memref<1x32xf32, #tpu.memory_space<vmem>>, vector<1x32xf32>
    %4 = vector.broadcast %3 : vector<1x32xf32> to vector<32x32xf32>
    %5 = arith.addf %2, %4 : vector<32x32xf32>
    %c0_5 = arith.constant 0 : index
    %c0_6 = arith.constant 0 : index
    %6 = vector.load %arg4[%c0_5, %c0_6] : memref<32x32xf32, #tpu.memory_space<vmem>>, vector<32x32xf32>
    tpu.vector_store %arg4[%c0_5, %c0_6], %5 {strides = array<i32>} : memref<32x32xf32, #tpu.memory_space<vmem>>, vector<32x32xf32>,
    return
  }
  func.func @transform_0(%arg0: i32) -> (i32, i32) {
    %c0_i32 = arith.constant 0 : i32
    %c0_i32_0 = arith.constant 0 : i32
    return %arg0, %c0_i32 : i32, i32
  }
  func.func @transform_1(%arg0: i32) -> (i32, i32) {
    %c0_i32 = arith.constant 0 : i32
    %c0_i32_0 = arith.constant 0 : i32
    %c0_i32_1 = arith.constant 0 : i32
    return %c0_i32, %c0_i32_0 : i32, i32
  }
  func.func @transform_2(%arg0: i32) -> (i32, i32) {
    %c0_i32 = arith.constant 0 : i32
    %c0_i32_0 = arith.constant 0 : i32
    %c0_i32_1 = arith.constant 0 : i32
    return %c0_i32, %c0_i32_0 : i32, i32
  }
  func.func @transform_3(%arg0: i32) -> (i32, i32) {
    %c0_i32 = arith.constant 0 : i32
    %c0_i32_0 = arith.constant 0 : i32
    return %arg0, %c0_i32 : i32, i32
  }
}

</mosaic_0001>

<llo_original>
// kernel: tpu_custom_call.1
$region0: #{tpu_custom_call.1}
  #allocation0 [shape = 'u32[]', space=smem, size = 0x4, offset = 0x4, fixed_abs, tag = 'smem constant byte address 0x4 - core index']
  #allocation1 [shape = 'u32[72,128]{1,0:T(1,128)}', space=vmem, size = 0x9000, scoped, tag = 'internal scratch']
  %s0 = inlined_call_operand.vmem [shape: bf16[32,64], index: 0, kind: input, shape index: {}]
  %s1 = inlined_call_operand.vmem [shape: bf16[64,32], index: 1, kind: input, shape index: {}]
  %s2 = inlined_call_operand.vmem [shape: f32[1,32], index: 2, kind: input, shape index: {}]
  %s3 = inlined_call_operand.hbm [shape: f32[32,32], index: 3, kind: output, shape index: {}]
  %s4 = sld [smem:[#allocation0]]
  $region22: #{tpu_custom_call.1} parent=0
    _
  %s6 = ssub.s32 1, %s4
  %s7 = scalar_select 0, %s6, %s4
  $region1: #{tpu_custom_call.1} parent=0
    #allocation2 [shape = 'u8[16384]{0}', space=vmem, size = 0x4000, scoped, tag = 'output window, operand 0, single buffered']
    #allocation3 [shape = 's32[1]{0}', space=sflag, size = 0x4, scoped, tag = 'scoped memory for tpu_custom_call.1']
    %8 = vsyncpa [#allocation3], 0
    // Predicated region
    $region2: #{tpu_custom_call.1} parent=1 // pred_check
      _
    $region3: #{tpu_custom_call.1} parent=1 // pred_check_branch
      %10 = sbr.rel (0) target = $region5
    $region4: #{tpu_custom_call.1} parent=1 // pred_region
      _
    $region5: #{tpu_custom_call.1} parent=1 // pred_fallthru
      _
    // Predicated region
    $region6: #{tpu_custom_call.1} parent=1 // pred_check
      _
    $region7: #{tpu_custom_call.1} parent=1 // pred_check_branch
      %12 = sbr.rel (0) target = $region9
    $region8: #{tpu_custom_call.1} parent=1 // pred_region
      _
    $region9: #{tpu_custom_call.1} parent=1 // pred_fallthru
      _
    // Predicated region
    $region10: #{tpu_custom_call.1} parent=1 // pred_check
      _
    $region11: #{tpu_custom_call.1} parent=1 // pred_check_branch
      %14 = sbr.rel (0) target = $region13
    $region12: #{tpu_custom_call.1} parent=1 // pred_region
      _
    $region13: #{tpu_custom_call.1} parent=1 // pred_fallthru
      _
    %v16 = vld [vmem:[%s0] sm:$0xf]
    %v17 = vld [vmem:[%s0 + $0x4] sm:$0xf]
    %v18 = vld [vmem:[%s0 + $0x8] sm:$0xf]
    %v19 = vld [vmem:[%s0 + $0xc] sm:$0xf]
    %v20 = vld [vmem:[%s1] sm:$0xf]
    %v21 = vld [vmem:[%s1 + $0x4] sm:$0xf]
    %v22 = vld [vmem:[%s1 + $0x8] sm:$0xf]
    %v23 = vld [vmem:[%s1 + $0xc] sm:$0xf]
    %v24 = vld [vmem:[%s1 + $0x10] sm:$0xf]
    %v25 = vld [vmem:[%s1 + $0x14] sm:$0xf]
    %v26 = vld [vmem:[%s1 + $0x18] sm:$0xf]
    %v27 = vld [vmem:[%s1 + $0x1c] sm:$0xf]
    %v28 = vld [vmem:[%s2] sm:$0x1]
    %v30 = vperm.slane %v28, 0
    %v36 = vunpack.c.l.b16 %v16
    %v37 = vunpack.c.l.b16 %v17
    %v38 = vunpack.c.l.b16 %v18
    %v39 = vunpack.c.l.b16 %v19
    %v40 = vpack.c.b16 %v37, %v36
    %v41 = vpack.c.b16 %v39, %v38
    %v50 = vunpack.c.l.b16 %v20
    %v51 = vunpack.c.l.b16 %v21
    %v52 = vunpack.c.l.b16 %v22
    %v53 = vunpack.c.l.b16 %v23
    %v54 = vunpack.c.l.b16 %v24
    %v55 = vunpack.c.l.b16 %v25
    %v56 = vunpack.c.l.b16 %v26
    %v57 = vunpack.c.l.b16 %v27
    %v58 = vpack.c.b16 %v51, %v50
    %v59 = vpack.c.b16 %v53, %v52
    %v60 = vpack.c.b16 %v55, %v54
    %v61 = vpack.c.b16 %v57, %v56
    %vm66 = vcmask 523264
    %v68 = vsel %vm66, %v40, 0
    %v71 = vsel %vm66, %v41, 0
    %73 = vmatpush.bf16.msra.mxu0 0
    %74 = vmatpush.bf16.msra.mxu0 0
    %75 = vmatpush.bf16.msra.mxu0 0
    %76 = vmatpush.bf16.msra.mxu0 0
    %77 = vmatpush.bf16.msra.mxu0 %v61
    %78 = vmatpush.bf16.msra.mxu0 %v60
    %79 = vmatpush.bf16.msra.mxu0 %v59
    %80 = vmatpush.bf16.msra.mxu0 %v58
    %81 = vmatmul.bf16.gmra.mxu0 %v68
    %v82 = vpop.f32.mrf.mxu0
    %v83 = vadd.f32 %v30, %v82
    %v84 = vpop.f32.mrf.mxu0
    %v85 = vadd.f32 %v30, %v84
    %86 = vmatmul.bf16.gmra.mxu0 %v71
    %v87 = vpop.f32.mrf.mxu0
    %v88 = vadd.f32 %v30, %v87
    %v89 = vpop.f32.mrf.mxu0
    %v90 = vadd.f32 %v30, %v89
    %91 = vdwg.mxu0
    %vm92 = vcmask 261120
    %93 = vst.msk [vmem:[#allocation2] sm:$0xff] %vm92, %v83
    %94 = vst.msk [vmem:[#allocation2 + $0x8] sm:$0xff] %vm92, %v85
    %95 = vst.msk [vmem:[#allocation2 + $0x10] sm:$0xff] %vm92, %v88
    %96 = vst.msk [vmem:[#allocation2 + $0x18] sm:$0xff] %vm92, %v90
    // Predicated region
    $region14: #{tpu_custom_call.1} parent=1 // pred_check
      _
    $region15: #{tpu_custom_call.1} parent=1 // pred_check_branch
      %98 = sbr.rel (0) target = $region17
    $region16: #{tpu_custom_call.1} parent=1 // pred_region
      %100 = vsyncadd [#allocation3], 0
      %s101 = sshll.u32 [#allocation2], 4
      %s102 = int_to_ptr.vmem [resolvable:$true] %s101
      %s103 = sshll.u32 %s3, 4
      %s104 = int_to_ptr.hbm [resolvable:$true] %s103
      %109 = dma.vmem_to_hbm [thread:$0]  %s102, 512, %s104, [#allocation3], 128, 128, 8
    $region17: #{tpu_custom_call.1} parent=1 // pred_fallthru
      _
    // Predicated region
    $region18: #{tpu_custom_call.1} parent=1 // pred_check
      _
    $region19: #{tpu_custom_call.1} parent=1 // pred_check_branch
      %111 = sbr.rel (0) target = $region21
    $region20: #{tpu_custom_call.1} parent=1 // pred_region
      %113 = dma.done [#allocation3], 512
    $region21: #{tpu_custom_call.1} parent=1 // pred_fallthru
      _
    %114 = vsyncpa [#allocation3], 1

</llo_original>
